<compile_context>
chip_gen: v7x
topology: tpu7x:2x2x1
jax: 0.10.0
libtpu: 0.0.40
codegen_flags: <defaults>
</compile_context>

<pallas_src>
import jax
import jax.numpy as jnp
from jax.experimental import pallas as pl
from jax.experimental.pallas import tpu as pltpu

LANE = 128


def ridge_kernel(x_ref, w_ref, o_ref):
    # x_ref: (TILE_B, D)   w_ref: (1, D)   o_ref: (1, TILE_B)  (batch along lanes)
    x = x_ref[...].astype(jnp.float32)   # f32 VPU math (v5e has no bf16 VPU)
    w = w_ref[...].astype(jnp.float32)   # (1, D) broadcasts across rows
    y = jnp.sum(x * w, axis=-1)          # (TILE_B,) per-row dot products
    o_ref[...] = y[None, :].astype(o_ref.dtype)


def _choose_tile_b(batch_pad, D, itemsize, tile_budget_bytes=4 * 1024 * 1024):
    """Rows per grid step: a multiple of 128 whose double-buffered x tile stays
    comfortably inside VMEM on every TPU generation (v7x: 64 MiB physical)."""
    rows = max(LANE, tile_budget_bytes // max(1, D * itemsize))
    rows = (rows // LANE) * LANE
    return min(rows, batch_pad)


def ridge_regression(x, weight, *, tile_b=None):
    """x: (B, D), weight: (1, D) [PyTorch nn.Linear(D, 1, bias=False) layout].

    Returns (B, 1), matching RidgeRegression.forward.
    """
    B, D = x.shape
    assert weight.shape == (1, D)

    # Pick tile and pad the batch so the grid divides evenly; padded rows are
    # computed on zeros and sliced off at the end.
    b_lane_pad = pl.cdiv(B, LANE) * LANE
    if tile_b is None:
        tile_b = _choose_tile_b(b_lane_pad, D, x.dtype.itemsize)
    assert tile_b % LANE == 0
    b_pad = pl.cdiv(B, tile_b) * tile_b
    if b_pad != B:
        x = jnp.pad(x, ((0, b_pad - B), (0, 0)))

    grid = (b_pad // tile_b,)

    # TODO(synk): if D grows beyond ~8K f32 features, add a K (reduction) grid
    # axis with an f32 VMEM accumulator (pl.when init/finalize) instead of a
    # single (TILE_B, D) block, to stay inside v7x's 64 MiB VMEM.
    out = pl.pallas_call(
        ridge_kernel,
        out_shape=jax.ShapeDtypeStruct((1, b_pad), x.dtype),
        grid_spec=pltpu.PrefetchScalarGridSpec(
            num_scalar_prefetch=0,
            grid=grid,
            in_specs=[
                pl.BlockSpec((tile_b, D), lambda i: (i, 0)),  # streamed x tile
                pl.BlockSpec((1, D), lambda i: (0, 0)),       # weight, replicated
            ],
            out_specs=pl.BlockSpec((1, tile_b), lambda i: (0, i)),  # lane-dense
        ),
        compiler_params=pltpu.CompilerParams(
            dimension_semantics=("parallel",),     # megacore: shard tiles on v7x
            vmem_limit_bytes=32 * 1024 * 1024,     # explicit, safe on v5e..v7x
        ),
        cost_estimate=pl.CostEstimate(
            flops=2 * b_pad * D,
            transcendentals=0,
            bytes_accessed=b_pad * D * x.dtype.itemsize
            + D * weight.dtype.itemsize
            + b_pad * x.dtype.itemsize,
        ),
    )(x, weight)

    # (1, b_pad) lane-dense -> PyTorch (B, 1) layout.
    return out.reshape(b_pad, 1)[:B]


if __name__ == "__main__":
    key = jax.random.PRNGKey(0)
    kx, kw = jax.random.split(key)

    # input_dim = 128; batch deliberately not a tile multiple to exercise padding.
    B, D = 300, 128
    x = jax.random.normal(kx, (B, D), dtype=jnp.float32)

    # Deterministic weight init mimicking nn.Linear's uniform(-1/sqrt(D), 1/sqrt(D))
    bound = 1.0 / jnp.sqrt(jnp.float32(D))
    weight = jax.random.uniform(kw, (1, D), dtype=jnp.float32,
                                minval=-bound, maxval=bound)

    # tile_b=128 -> 3 grid steps at this toy size (exercises the tiled pipeline).
    out = ridge_regression(x, weight, tile_b=128)
    jax.block_until_ready(out)

    # Correctness check against a pure-f32 reference of the PyTorch forward
    # (row-wise dot; avoids MXU default-precision ambiguity in the reference).
    ref = jnp.sum(x * weight, axis=-1, keepdims=True)
    assert out.shape == (B, 1)
    assert jnp.allclose(out, ref, atol=1e-5, rtol=1e-5)

    print("KERNEL_OK")
</pallas_src>

<mosaic_0001>
module attributes {stable_mosaic.version = 11 : i64} {
  func.func @ridge_kernel(%arg0: i32, %arg1: memref<128x128xf32, #tpu.memory_space<vmem>>, %arg2: memref<1x128xf32, #tpu.memory_space<vmem>>, %arg3: memref<1x128xf32, #tpu.memory_space<vmem>>) attributes {dimension_semantics = [#tpu.dimension_semantics<parallel>], iteration_bounds = array<i64: 3>, scalar_prefetch = 0 : i64, scratch_operands = 0 : i64, tpu.core_type = #tpu.core_type<tc>, window_params = [{transform_indices = @transform_0, window_bounds = array<i64: 128, 128>}, {pipeline_mode = #tpu.pipeline_mode<synchronous>, transform_indices = @transform_1, window_bounds = array<i64: 1, 128>}, {transform_indices = @transform_2, window_bounds = array<i64: 1, 128>}]} {
    %c0 = arith.constant 0 : index
    %c0_0 = arith.constant 0 : index
    %0 = vector.load %arg1[%c0, %c0_0] : memref<128x128xf32, #tpu.memory_space<vmem>>, vector<128x128xf32>
    %c0_1 = arith.constant 0 : index
    %c0_2 = arith.constant 0 : index
    %1 = vector.load %arg2[%c0_1, %c0_2] : memref<1x128xf32, #tpu.memory_space<vmem>>, vector<1x128xf32>
    %2 = vector.broadcast %1 : vector<1x128xf32> to vector<128x128xf32>
    %3 = arith.mulf %0, %2 : vector<128x128xf32>
    %cst = arith.constant dense<0.000000e+00> : vector<128xf32>
    %4 = vector.multi_reduction <add>, %3, %cst [1] : vector<128x128xf32> to vector<128xf32>
    %5 = vector.shape_cast %4 : vector<128xf32> to vector<1x128xf32>
    %c0_3 = arith.constant 0 : index
    %c0_4 = arith.constant 0 : index
    %6 = vector.load %arg3[%c0_3, %c0_4] : memref<1x128xf32, #tpu.memory_space<vmem>>, vector<1x128xf32>
    tpu.vector_store %arg3[%c0_3, %c0_4], %5 {strides = array<i32>} : memref<1x128xf32, #tpu.memory_space<vmem>>, vector<1x128xf32>,
    return
  }
  func.func @transform_0(%arg0: i32) -> (i32, i32) {
    %c0_i32 = arith.constant 0 : i32
    %c0_i32_0 = arith.constant 0 : i32
    return %arg0, %c0_i32 : i32, i32
  }
  func.func @transform_1(%arg0: i32) -> (i32, i32) {
    %c0_i32 = arith.constant 0 : i32
    %c0_i32_0 = arith.constant 0 : i32
    %c0_i32_1 = arith.constant 0 : i32
    return %c0_i32, %c0_i32_0 : i32, i32
  }
  func.func @transform_2(%arg0: i32) -> (i32, i32) {
    %c0_i32 = arith.constant 0 : i32
    %c0_i32_0 = arith.constant 0 : i32
    return %c0_i32, %arg0 : i32, i32
  }
}

</mosaic_0001>

<llo_original>
// kernel: tpu_custom_call.1
$region0: #{tpu_custom_call.1}
  #allocation0 [shape = 'u32[]', space=smem, size = 0x4, offset = 0x4, fixed_abs, tag = 'smem constant byte address 0x4 - core index']
  #allocation1 [shape = 'u32[144,128]{1,0:T(1,128)}', space=vmem, size = 0x12000, scoped, tag = 'internal scratch']
  %s0 = inlined_call_operand.hbm [shape: f32[384,128], index: 0, kind: input, shape index: {}]
  %s1 = inlined_call_operand.vmem [shape: f32[1,128], index: 1, kind: input, shape index: {}]
  %s2 = inlined_call_operand.hbm [shape: f32[1,384], index: 2, kind: output, shape index: {}]
  %s3 = sld [smem:[#allocation0]]
  $region45: #{tpu_custom_call.1} parent=0
    _
  %s5 = ssub.s32 1, %s3
  %s6 = scalar_select 0, %s5, %s3
  $region1: #{tpu_custom_call.1} parent=0
    #allocation2 [shape = 'u8[131072]{0}', space=vmem, size = 0x20000, scoped, tag = 'input window, operand 0']
    #allocation3 [shape = 's32[2]{0}', space=sflag, size = 0x8, scoped, tag = 'scoped memory for tpu_custom_call.1']
    #allocation4 [shape = 's32[2]{0}', space=sflag, size = 0x8, scoped, tag = 'scoped memory for tpu_custom_call.1']
    #allocation5 [shape = 'u8[1024]{0}', space=vmem, size = 0x400, scoped, tag = 'output window, operand 0']
    %7 = vsyncpa [#allocation3], 0
    %s8 = scalar_lea.sflag [#allocation3], 1
    %9 = vsyncpa %s8, 0
    %10 = vsyncpa [#allocation4], 0
    %s11 = scalar_lea.sflag [#allocation4], 1
    %12 = vsyncpa %s11, 0
    loop: start=0, step=1, limit=5
    $region2: #{tpu_custom_call.1} parent=1 // loop_pre_header
      _
    $region3: #{tpu_custom_call.1} parent=1 // loop_header
      %s14 = sphi 0, %s18
      %p15 = scmp.ge.s32.totalorder %s14, 5
      %s24 = sphi 0, %s26
      %s27 = sphi 0, %s24
      %s28 = sphi 0, %s27
      %s44 = sphi 0, %s28
      %s48 = sphi 0, %s48
      %s50 = sphi 0, %s48
      %s51 = sphi 0, %s50
      %s65 = sphi 0, %s51
      %s71 = sphi 0, %s73
      %s74 = sphi 0, %s71
      %s75 = sphi 0, %s74
      %s91 = sphi 0, %s75
    $region4: #{tpu_custom_call.1} parent=1 // loop_header_branch
      %17 = sbr.rel (%p15) target = $region8
    $region5: #{tpu_custom_call.1} parent=1 // loop_body
      %s19 = ssub.s32 %s14, 1
      %s20 = ssub.s32 %s14, 2
      %s21 = sadd.s32 %s14, 1
      %s22 = ssub.s32 %s14, %s21
      %p23 = scmp.eq.s32.totalorder %s22, 0
      %s25 = sadd.s32 %s24, 1
      %s26 = scalar_select %p23, %s24, %s25
      %p29 = pneg %p23
      %p30 = scmp.eq.s32.totalorder %s14, 2
      %p31 = por %p29, %p30
      %p32 = scmp.ne.s32.totalorder %s24, %s27
      %p33 = scmp.eq.s32.totalorder %s14, 0
      %p34 = por %p32, %p33
      %p35 = scmp.ne.s32.totalorder %s24, %s27
      %p36 = scmp.eq.s32.totalorder %s19, 2
      %p37 = por %p35, %p36
      %p38 = scmp.ne.s32.totalorder %s27, %s28
      %p39 = scmp.eq.s32.totalorder %s19, 0
      %p40 = por %p38, %p39
      %p41 = scmp.ne.s32.totalorder %s27, %s28
      %p42 = scmp.eq.s32.totalorder %s20, 2
      %p43 = por %p41, %p42
      %p45 = scmp.ne.s32.totalorder %s28, %s44
      %p46 = scmp.eq.s32.totalorder %s20, 0
      %p47 = por %p45, %p46
      %s49 = sadd.s32 %s48, 1
      %p52 = scmp.eq.s32.totalorder %s14, 2
      %p53 = scmp.ne.s32.totalorder %s48, %s50
      %p54 = scmp.eq.s32.totalorder %s14, 0
      %p55 = por %p53, %p54
      %p56 = scmp.ne.s32.totalorder %s48, %s50
      %p57 = scmp.eq.s32.totalorder %s19, 2
      %p58 = por %p56, %p57
      %p59 = scmp.ne.s32.totalorder %s50, %s51
      %p60 = scmp.eq.s32.totalorder %s19, 0
      %p61 = por %p59, %p60
      %p62 = scmp.ne.s32.totalorder %s50, %s51
      %p63 = scmp.eq.s32.totalorder %s20, 2
      %p64 = por %p62, %p63
      %p66 = scmp.ne.s32.totalorder %s51, %s65
      %p67 = scmp.eq.s32.totalorder %s20, 0
      %p68 = por %p66, %p67
      %s69 = ssub.s32 %s14, %s21
      %p70 = scmp.eq.s32.totalorder %s69, 0
      %s72 = sadd.s32 %s71, 1
      %s73 = scalar_select %p70, %s71, %s72
      %p76 = pneg %p70
      %p77 = scmp.eq.s32.totalorder %s14, 2
      %p78 = por %p76, %p77
      %p79 = scmp.ne.s32.totalorder %s71, %s74
      %p80 = scmp.eq.s32.totalorder %s14, 0
      %p81 = por %p79, %p80
      %p82 = scmp.ne.s32.totalorder %s71, %s74
      %p83 = scmp.eq.s32.totalorder %s19, 2
      %p84 = por %p82, %p83
      %p85 = scmp.ne.s32.totalorder %s74, %s75
      %p86 = scmp.eq.s32.totalorder %s19, 0
      %p87 = por %p85, %p86
      %p88 = scmp.ne.s32.totalorder %s74, %s75
      %p89 = scmp.eq.s32.totalorder %s20, 2
      %p90 = por %p88, %p89
      %p92 = scmp.ne.s32.totalorder %s75, %s91
      %p93 = scmp.eq.s32.totalorder %s20, 0
      %p94 = por %p92, %p93
      %p95 = scmp.le.s32.totalorder 1, %s14
      %p96 = scmp.lt.s32.totalorder %s14, 4
      %p97 = pnand %p95, %p96
      %p98 = pneg %p97
      // Predicated region
      $region9: #{tpu_custom_call.1} parent=5 // pred_check
        _
      $region10: #{tpu_custom_call.1} parent=5 // pred_check_branch
        %100 = sbr.rel (%p97) target = $region12
      $region11: #{tpu_custom_call.1} parent=5 // pred_region
        %s101 = ssub.s32 %s14, 1
        // Predicated region
        $region13: #{tpu_custom_call.1} parent=11 // pred_check
          %p102 = pneg %p61
        $region14: #{tpu_custom_call.1} parent=11 // pred_check_branch
          %104 = sbr.rel (%p102) target = $region16
        $region15: #{tpu_custom_call.1} parent=11 // pred_region
          _
        $region16: #{tpu_custom_call.1} parent=11 // pred_fallthru
          _
      $region12: #{tpu_custom_call.1} parent=5 // pred_fallthru
        _
      %p105 = scmp.lt.s32.totalorder %s14, 3
      // Predicated region
      $region17: #{tpu_custom_call.1} parent=5 // pred_check
        %p106 = pneg %p105
      $region18: #{tpu_custom_call.1} parent=5 // pred_check_branch
        %108 = sbr.rel (%p106) target = $region20
      $region19: #{tpu_custom_call.1} parent=5 // pred_region
        // Predicated region
        $region21: #{tpu_custom_call.1} parent=19 // pred_check
          %p109 = pneg %p34
        $region22: #{tpu_custom_call.1} parent=19 // pred_check_branch
          %111 = sbr.rel (%p109) target = $region24
        $region23: #{tpu_custom_call.1} parent=19 // pred_region
          %s112 = sand.u32 %s24, 1
          %s113 = scalar_lea.sflag [#allocation3], %s112
          %s114 = sand.u32 %s24, 1
          %s115 = smul.addr %s114, 128
          %s116 = scalar_lea.vmem [#allocation2], %s115
          %s117 = smul.u32 16, %s14
          %s119 = ssub.s32 2048, 2048
          %120 = vsyncadd %s113, %s119
          %s121 = smul.addr %s117, 128
          %s122 = scalar_lea.hbm %s0, %s121
          %s123 = sshll.u32 %s116, 4
          %s124 = int_to_ptr.vmem [resolvable:$true] %s123
          %129 = dma.hbm_to_vmem [thread:$0]  %s122, 2048, %s124, %s113, 128, 128, 8
        $region24: #{tpu_custom_call.1} parent=19 // pred_fallthru
          _
      $region20: #{tpu_custom_call.1} parent=5 // pred_fallthru
        _
      %p130 = scmp.le.s32.totalorder 1, %s14
      %p131 = scmp.lt.s32.totalorder %s14, 4
      %p132 = pnand %p130, %p131
      %p133 = pneg %p132
      // Predicated region
      $region25: #{tpu_custom_call.1} parent=5 // pred_check
        _
      $region26: #{tpu_custom_call.1} parent=5 // pred_check_branch
        %135 = sbr.rel (%p132) target = $region28
      $region27: #{tpu_custom_call.1} parent=5 // pred_region
        %s136 = ssub.s32 %s14, 1
        %s137 = sand.u32 %s27, 1
        %s138 = scalar_lea.sflag [#allocation3], %s137
        %s139 = sand.u32 %s27, 1
        %s140 = smul.addr %s139, 128
        %s141 = scalar_lea.vmem [#allocation2], %s140
        // Predicated region
        $region29: #{tpu_custom_call.1} parent=27 // pred_check
          %p142 = pneg %p40
        $region30: #{tpu_custom_call.1} parent=27 // pred_check_branch
          %144 = sbr.rel (%p142) target = $region32
        $region31: #{tpu_custom_call.1} parent=27 // pred_region
          %145 = dma.done %s138, 2048
        $region32: #{tpu_custom_call.1} parent=27 // pred_fallthru
          _
        %s146 = sand.u32 %s27, 1
        %s147 = scalar_lea.sflag [#allocation3], %s146
        %s148 = sand.u32 %s27, 1
        %s149 = smul.addr %s148, 128
        %s150 = scalar_lea.vmem [#allocation2], %s149
        %p151 = pneg %p40
        %p152 = pneg %p37
        %p153 = pneg %p61
        %p154 = pneg %p58
        %p155 = pneg %p87
        %p156 = pneg %p84
        %s157 = sand.u32 %s74, 1
        %s158 = scalar_lea.sflag [#allocation4], %s157
        %s159 = sand.u32 %s74, 1
        %s160 = scalar_lea.vmem [#allocation5], %s159
        %s161 = smul.u32 16, %s19
        %v162 = vld [vmem:[%s141] sm:$0xff]
        %v163 = vld [vmem:[%s141 + $0x8] sm:$0xff]
        %v164 = vld [vmem:[%s141 + $0x10] sm:$0xff]
        %v165 = vld [vmem:[%s141 + $0x18] sm:$0xff]
        %v166 = vld [vmem:[%s141 + $0x20] sm:$0xff]
        %v167 = vld [vmem:[%s141 + $0x28] sm:$0xff]
        %v168 = vld [vmem:[%s141 + $0x30] sm:$0xff]
        %v169 = vld [vmem:[%s141 + $0x38] sm:$0xff]
        %v170 = vld [vmem:[%s141 + $0x40] sm:$0xff]
        %v171 = vld [vmem:[%s141 + $0x48] sm:$0xff]
        %v172 = vld [vmem:[%s141 + $0x50] sm:$0xff]
        %v173 = vld [vmem:[%s141 + $0x58] sm:$0xff]
        %v174 = vld [vmem:[%s141 + $0x60] sm:$0xff]
        %v175 = vld [vmem:[%s141 + $0x68] sm:$0xff]
        %v176 = vld [vmem:[%s141 + $0x70] sm:$0xff]
        %v177 = vld [vmem:[%s141 + $0x78] sm:$0xff]
        %v178 = vld [vmem:[%s1] sm:$0x1]
        %v180 = vlaneseq
        %v181 = vshrl.u32 %v180, 7
        %v182 = vsub.s32 0, %v181
        %v183 = vrot.slane %v178, %v182
        %v185 = vmul.f32 %v162, %v183
        %v186 = vmul.f32 %v163, %v183
        %v187 = vmul.f32 %v164, %v183
        %v188 = vmul.f32 %v165, %v183
        %v189 = vmul.f32 %v166, %v183
        %v190 = vmul.f32 %v167, %v183
        %v191 = vmul.f32 %v168, %v183
        %v192 = vmul.f32 %v169, %v183
        %v193 = vmul.f32 %v170, %v183
        %v194 = vmul.f32 %v171, %v183
        %v195 = vmul.f32 %v172, %v183
        %v196 = vmul.f32 %v173, %v183
        %v197 = vmul.f32 %v174, %v183
        %v198 = vmul.f32 %v175, %v183
        %v199 = vmul.f32 %v176, %v183
        %v200 = vmul.f32 %v177, %v183
        %201 = vadd.xlane.f32.xlu0 %v185
        %v202 = vpop.xlane.xlu0 %201
        %203 = vadd.xlane.f32.xlu0 %v186
        %v204 = vpop.xlane.xlu0 %203
        %205 = vadd.xlane.f32.xlu0 %v187
        %v206 = vpop.xlane.xlu0 %205
        %207 = vadd.xlane.f32.xlu0 %v188
        %v208 = vpop.xlane.xlu0 %207
        %209 = vadd.xlane.f32.xlu0 %v189
        %v210 = vpop.xlane.xlu0 %209
        %211 = vadd.xlane.f32.xlu0 %v190
        %v212 = vpop.xlane.xlu0 %211
        %213 = vadd.xlane.f32.xlu0 %v191
        %v214 = vpop.xlane.xlu0 %213
        %215 = vadd.xlane.f32.xlu0 %v192
        %v216 = vpop.xlane.xlu0 %215
        %217 = vadd.xlane.f32.xlu0 %v193
        %v218 = vpop.xlane.xlu0 %217
        %219 = vadd.xlane.f32.xlu0 %v194
        %v220 = vpop.xlane.xlu0 %219
        %221 = vadd.xlane.f32.xlu0 %v195
        %v222 = vpop.xlane.xlu0 %221
        %223 = vadd.xlane.f32.xlu0 %v196
        %v224 = vpop.xlane.xlu0 %223
        %225 = vadd.xlane.f32.xlu0 %v197
        %v226 = vpop.xlane.xlu0 %225
        %227 = vadd.xlane.f32.xlu0 %v198
        %v228 = vpop.xlane.xlu0 %227
        %229 = vadd.xlane.f32.xlu0 %v199
        %v230 = vpop.xlane.xlu0 %229
        %231 = vadd.xlane.f32.xlu0 %v200
        %v232 = vpop.xlane.xlu0 %231
        %v249 = vlaneseq
        %v250 = vand.u32 %v249, 127
        %v251 = vlaneseq
        %v252 = vshrl.u32 %v251, 7
        %v253 = vsub.s32 %v250, %v252
        %v254 = vrot.slane %v202, %v253
        %v255 = vadd.s32 %v250, 4294967288
        %v256 = vlaneseq
        %v257 = vshrl.u32 %v256, 7
        %v258 = vsub.s32 %v255, %v257
        %v259 = vrot.slane %v204, %v258
        %vm260 = vcmask 130112
        %v261 = vsel %vm260, %v259, %v254
        %v262 = vadd.s32 %v250, 4294967280
        %v263 = vlaneseq
        %v264 = vshrl.u32 %v263, 7
        %v265 = vsub.s32 %v262, %v264
        %v266 = vrot.slane %v206, %v265
        %vm267 = vcmask 195712
        %v268 = vsel %vm267, %v266, %v261
        %v269 = vadd.s32 %v250, 4294967272
        %v270 = vlaneseq
        %v271 = vshrl.u32 %v270, 7
        %v272 = vsub.s32 %v269, %v271
        %v273 = vrot.slane %v208, %v272
        %vm274 = vcmask 261312
        %v275 = vsel %vm274, %v273, %v268
        %v276 = vadd.s32 %v250, 4294967264
        %v277 = vlaneseq
        %v278 = vshrl.u32 %v277, 7
        %v279 = vsub.s32 %v276, %v278
        %v280 = vrot.slane %v210, %v279
        %vm281 = vcmask 326912
        %v282 = vsel %vm281, %v280, %v275
        %v283 = vadd.s32 %v250, 4294967256
        %v284 = vlaneseq
        %v285 = vshrl.u32 %v284, 7
        %v286 = vsub.s32 %v283, %v285
        %v287 = vrot.slane %v212, %v286
        %vm288 = vcmask 392512
        %v289 = vsel %vm288, %v287, %v282
        %v290 = vadd.s32 %v250, 4294967248
        %v291 = vlaneseq
        %v292 = vshrl.u32 %v291, 7
        %v293 = vsub.s32 %v290, %v292
        %v294 = vrot.slane %v214, %v293
        %vm295 = vcmask 458112
        %v296 = vsel %vm295, %v294, %v289
        %v297 = vadd.s32 %v250, 4294967240
        %v298 = vlaneseq
        %v299 = vshrl.u32 %v298, 7
        %v300 = vsub.s32 %v297, %v299
        %v301 = vrot.slane %v216, %v300
        %vm302 = vcmask 523712
        %v303 = vsel %vm302, %v301, %v296
        %v304 = vadd.s32 %v250, 4294967232
        %v305 = vlaneseq
        %v306 = vshrl.u32 %v305, 7
        %v307 = vsub.s32 %v304, %v306
        %v308 = vrot.slane %v218, %v307
        %vm309 = vcmask 589312
        %v310 = vsel %vm309, %v308, %v303
        %v311 = vadd.s32 %v250, 4294967224
        %v312 = vlaneseq
        %v313 = vshrl.u32 %v312, 7
        %v314 = vsub.s32 %v311, %v313
        %v315 = vrot.slane %v220, %v314
        %vm316 = vcmask 654912
        %v317 = vsel %vm316, %v315, %v310
        %v318 = vadd.s32 %v250, 4294967216
        %v319 = vlaneseq
        %v320 = vshrl.u32 %v319, 7
        %v321 = vsub.s32 %v318, %v320
        %v322 = vrot.slane %v222, %v321
        %vm323 = vcmask 720512
        %v324 = vsel %vm323, %v322, %v317
        %v325 = vadd.s32 %v250, 4294967208
        %v326 = vlaneseq
        %v327 = vshrl.u32 %v326, 7
        %v328 = vsub.s32 %v325, %v327
        %v329 = vrot.slane %v224, %v328
        %vm330 = vcmask 786112
        %v331 = vsel %vm330, %v329, %v324
        %v332 = vadd.s32 %v250, 4294967200
        %v333 = vlaneseq
        %v334 = vshrl.u32 %v333, 7
        %v335 = vsub.s32 %v332, %v334
        %v336 = vrot.slane %v226, %v335
        %vm337 = vcmask 851712
        %v338 = vsel %vm337, %v336, %v331
        %v339 = vadd.s32 %v250, 4294967192
        %v340 = vlaneseq
        %v341 = vshrl.u32 %v340, 7
        %v342 = vsub.s32 %v339, %v341
        %v343 = vrot.slane %v228, %v342
        %vm344 = vcmask 917312
        %v345 = vsel %vm344, %v343, %v338
        %v346 = vadd.s32 %v250, 4294967184
        %v347 = vlaneseq
        %v348 = vshrl.u32 %v347, 7
        %v349 = vsub.s32 %v346, %v348
        %v350 = vrot.slane %v230, %v349
        %vm351 = vcmask 982912
        %v352 = vsel %vm351, %v350, %v345
        %v353 = vadd.s32 %v250, 4294967176
        %v354 = vlaneseq
        %v355 = vshrl.u32 %v354, 7
        %v356 = vsub.s32 %v353, %v355
        %v357 = vrot.slane %v232, %v356
        %vm358 = vcmask 1048512
        %v359 = vsel %vm358, %v357, %v352
        %361 = vst [vmem:[%s160] sm:$0x1] %v359
        %s362 = sand.u32 %s74, 1
        %s363 = scalar_lea.sflag [#allocation4], %s362
        %s364 = sand.u32 %s74, 1
        %s365 = scalar_lea.vmem [#allocation5], %s364
        // Predicated region
        $region33: #{tpu_custom_call.1} parent=27 // pred_check
          %p366 = pneg %p84
        $region34: #{tpu_custom_call.1} parent=27 // pred_check_branch
          %368 = sbr.rel (%p366) target = $region36
        $region35: #{tpu_custom_call.1} parent=27 // pred_region
          %s370 = ssub.s32 16, 16
          %371 = vsyncadd %s363, %s370
          %s372 = smul.addr %s19, 16
          %s373 = scalar_lea.hbm %s2, %s372
          %s375 = sshll.u32 %s365, 4
          %s376 = int_to_ptr.vmem [resolvable:$true] %s375
          %378 = dma.vmem_to_hbm [thread:$0]  %s376, 16, %s373, %s363
        $region36: #{tpu_custom_call.1} parent=27 // pred_fallthru
          _
      $region28: #{tpu_custom_call.1} parent=5 // pred_fallthru
        _
      %p379 = scmp.le.s32.totalorder 2, %s14
      // Predicated region
      $region37: #{tpu_custom_call.1} parent=5 // pred_check
        %p380 = pneg %p379
      $region38: #{tpu_custom_call.1} parent=5 // pred_check_branch
        %382 = sbr.rel (%p380) target = $region40
      $region39: #{tpu_custom_call.1} parent=5 // pred_region
        %s383 = ssub.s32 %s14, 2
        // Predicated region
        $region41: #{tpu_custom_call.1} parent=39 // pred_check
          %p384 = pneg %p90
        $region42: #{tpu_custom_call.1} parent=39 // pred_check_branch
          %386 = sbr.rel (%p384) target = $region44
        $region43: #{tpu_custom_call.1} parent=39 // pred_region
          %s387 = sand.u32 %s75, 1
          %s388 = scalar_lea.sflag [#allocation4], %s387
          %s389 = sand.u32 %s75, 1
          %s390 = scalar_lea.vmem [#allocation5], %s389
          %391 = dma.done %s388, 16
        $region44: #{tpu_custom_call.1} parent=39 // pred_fallthru
          _
      $region40: #{tpu_custom_call.1} parent=5 // pred_fallthru
        _
    $region6: #{tpu_custom_call.1} parent=1 // loop_footer
      %s18 = sadd.s32 1, %s14
    $region7: #{tpu_custom_call.1} parent=1 // loop_footer_branch
      %13 = sbr.rel target = $region3
    $region8: #{tpu_custom_call.1} parent=1 // loop_exit
      _
    %392 = vsyncpa [#allocation3], 1
    %s393 = scalar_lea.sflag [#allocation3], 1
    %394 = vsyncpa %s393, 1
    %395 = vsyncpa [#allocation4], 1
    %s396 = scalar_lea.sflag [#allocation4], 1
    %397 = vsyncpa %s396, 1

</llo_original>
